<compile_context>
chip_gen: v7x
topology: tpu7x:2x2x1
jax: 0.10.0
libtpu: 0.0.40
codegen_flags: <defaults>
</compile_context>

<pallas_src>
import functools

import jax
import jax.numpy as jnp
from jax.experimental import pallas as pl
from jax.experimental.pallas import tpu as pltpu


# --------------------------------------------------------------------------- #
# Kernel
# --------------------------------------------------------------------------- #
def _cross_attn_kernel(pts_ref, vec_ref, wq_ref, bq_ref, wk_ref, bk_ref,
                       wv_ref, bv_ref, out_ref, *, out_dim, mxu_dtype,
                       pack_output):
    Bt, Np, pts_dim = pts_ref.shape
    _, Nv, vec_dim = vec_ref.shape
    f32 = jnp.float32

    # Flatten the batch block into the M dim so the MXU sees one (Bt*N, K) x
    # (K, out) matmul per projection instead of Bt tiny ones.  (Leading-dim
    # merge: no relayout.)  MXU operands in bf16, accumulation in f32.
    vec2d = vec_ref[...].reshape(Bt * Nv, vec_dim).astype(mxu_dtype)
    pts2d = pts_ref[...].reshape(Bt * Np, pts_dim).astype(mxu_dtype)

    # Q projection: Wq/bq are pre-scaled by 1/sqrt(out_dim) in the wrapper.
    q2d = jnp.dot(vec2d, wq_ref[...].astype(mxu_dtype),
                  preferred_element_type=f32) + bq_ref[...]
    # Separate K and V projections (no fused K|V slice -> no in-tile lane shift).
    k2d = jnp.dot(pts2d, wk_ref[...].astype(mxu_dtype),
                  preferred_element_type=f32) + bk_ref[...]
    v2d = jnp.dot(pts2d, wv_ref[...].astype(mxu_dtype),
                  preferred_element_type=f32) + bv_ref[...]

    q = q2d.reshape(Bt, Nv, out_dim).astype(mxu_dtype)
    k = k2d.reshape(Bt, Np, out_dim).astype(mxu_dtype)
    v = v2d.reshape(Bt, Np, out_dim).astype(mxu_dtype)

    # Attention scores: contract the feature dim of both operands (no k.T).
    scores = jnp.einsum('bqd,bkd->bqk', q, k,
                        preferred_element_type=f32)            # (Bt, Nv, Np)

    # Numerically stable softmax over the points axis, all in f32, exact divide
    # (parity with F.softmax; the divide is once per (b,q) row, so cheap).
    m = jnp.max(scores, axis=-1, keepdims=True)
    e = jnp.exp(scores - m)
    denom = jnp.sum(e, axis=-1, keepdims=True)
    attn = (e / denom).astype(mxu_dtype)

    out = jnp.einsum('bqk,bkd->bqd', attn, v,
                     preferred_element_type=f32)               # (Bt, Nv, out_dim)

    if pack_output:
        # Lane-dense store: assemble (Bt, Nv*out_dim) along the lane axis (XLU is
        # otherwise idle here) and emit one wide, unmasked store per block.
        packed = jnp.concatenate([out[:, i, :] for i in range(Nv)], axis=-1)
        out_ref[:, 0, :] = packed.astype(out_ref.dtype)
    else:
        out_ref[...] = out.astype(out_ref.dtype)


# --------------------------------------------------------------------------- #
# VMEM-aware sizing helpers
# --------------------------------------------------------------------------- #
def _round_up(x, m):
    return (x + m - 1) // m * m


def _padded_tile_bytes(shape, itemsize=4):
    """Bytes a block occupies in VMEM after (8, 128) sublane/lane padding."""
    dims = list(shape)
    dims[-1] = _round_up(dims[-1], 128)
    if len(dims) >= 2:
        dims[-2] = _round_up(dims[-2], 8)
    n = itemsize
    for d in dims:
        n *= d
    return n


def _detect_vmem_capacity_bytes():
    try:
        info = pltpu.get_tpu_info()
        for attr in ("vmem_capacity_bytes", "vmem_bytes", "vmem_size_bytes"):
            cap = getattr(info, attr, None)
            if cap:
                return int(cap)
    except Exception:
        pass
    # Conservative fallback: v7x has the smallest VMEM (64 MiB per TensorCore).
    return 64 << 20


# --------------------------------------------------------------------------- #
# Wrapper
# --------------------------------------------------------------------------- #
def cross_attn_pallas(pts, vec, wq, bq, wk, bk, wv, bv, *,
                      block_b=None, mxu_dtype=jnp.bfloat16,
                      vmem_budget_bytes=None):
    """pts: (B, Np, pts_dim); vec: (B, Nv, vec_dim); weights (in, out); biases (1, out)."""
    B, Np, pts_dim = pts.shape
    Bv, Nv, vec_dim = vec.shape
    assert B == Bv, "pts and vec must share the batch dim"
    out_dim = wq.shape[1]

    # Fold 1/sqrt(out_dim) into the Q projection (constant fold, no per-tile mul).
    scale = 1.0 / (float(out_dim) ** 0.5)
    wq_s = (wq * scale).astype(wq.dtype)
    bq_s = (bq * scale).astype(bq.dtype)

    # Lane-dense packed output layout when out_dim alone is lane-sparse but
    # Nv*out_dim is a 128-lane multiple.
    pack_output = (out_dim % 128 != 0) and ((Nv * out_dim) % 128 == 0) and (Nv <= 64)
    out_block_tail = (1, Nv * out_dim) if pack_output else (Nv, out_dim)

    # ---- VMEM budget & batch-block sizing (real, padded, double-buffered) ----
    cap = _detect_vmem_capacity_bytes()
    if vmem_budget_bytes is None:
        # ~70% of physical VMEM: ~45 MiB on v7x (64 MiB/TC), ~90 MiB on v5e/v6e.
        vmem_budget_bytes = max(16 << 20, min(int(0.70 * cap), 100 << 20))
    vmem_budget_bytes = int(vmem_budget_bytes)

    isz = 4  # f32 blocks
    # Grid-invariant weight/bias blocks (counted double-buffered, conservative).
    weight_bytes = 2 * (_padded_tile_bytes((vec_dim, out_dim), isz)
                        + 2 * _padded_tile_bytes((pts_dim, out_dim), isz)
                        + 3 * _padded_tile_bytes((1, out_dim), isz))
    # Per-batch-element cost: pipelined blocks x2 (double buffering) plus an
    # estimate of the in-body intermediates (q/k/v, scores, exp, out) with slack.
    per_batch = 2 * (_padded_tile_bytes((1, Np, pts_dim), isz)
                     + _padded_tile_bytes((1, Nv, vec_dim), isz)
                     + _padded_tile_bytes((1,) + out_block_tail, isz))
    per_batch += int(1.5 * (2 * _padded_tile_bytes((1, Nv, out_dim), isz)
                            + 2 * _padded_tile_bytes((1, Np, out_dim), isz)
                            + 2 * _padded_tile_bytes((1, Nv, Np), isz)))

    if block_b is None:
        # Keep >=2 grid steps so two-TensorCore chips (v7x, megacore) can split
        # the "parallel" batch axis; on single-TC v5e/v6e the extra step costs
        # ~0.35 us, negligible.
        max_bt = B if B < 2 else pl.cdiv(B, 2)
        fit = max(1, (vmem_budget_bytes - weight_bytes) // max(per_batch, 1))
        block_b = max(1, min(max_bt, int(fit)))
    Bt = int(block_b)

    # Pad the batch so the grid tiles it exactly; padded rows are discarded.
    n_blocks = pl.cdiv(B, Bt)
    B_pad = n_blocks * Bt
    if B_pad != B:
        pad = B_pad - B
        pts = jnp.pad(pts, ((0, pad), (0, 0), (0, 0)))
        vec = jnp.pad(vec, ((0, pad), (0, 0), (0, 0)))

    kernel = functools.partial(_cross_attn_kernel, out_dim=out_dim,
                               mxu_dtype=mxu_dtype, pack_output=pack_output)

    if pack_output:
        out_shape = jax.ShapeDtypeStruct((B_pad, 1, Nv * out_dim), pts.dtype)
        out_spec = pl.BlockSpec((Bt, 1, Nv * out_dim), lambda b: (b, 0, 0))
    else:
        out_shape = jax.ShapeDtypeStruct((B_pad, Nv, out_dim), pts.dtype)
        out_spec = pl.BlockSpec((Bt, Nv, out_dim), lambda b: (b, 0, 0))

    grid_spec = pltpu.PrefetchScalarGridSpec(
        num_scalar_prefetch=0,
        grid=(n_blocks,),
        in_specs=[
            pl.BlockSpec((Bt, Np, pts_dim), lambda b: (b, 0, 0)),    # pts
            pl.BlockSpec((Bt, Nv, vec_dim), lambda b: (b, 0, 0)),    # vec
            pl.BlockSpec((vec_dim, out_dim), lambda b: (0, 0)),      # Wq (pre-scaled)
            pl.BlockSpec((1, out_dim), lambda b: (0, 0)),            # bq (pre-scaled)
            pl.BlockSpec((pts_dim, out_dim), lambda b: (0, 0)),      # Wk
            pl.BlockSpec((1, out_dim), lambda b: (0, 0)),            # bk
            pl.BlockSpec((pts_dim, out_dim), lambda b: (0, 0)),      # Wv
            pl.BlockSpec((1, out_dim), lambda b: (0, 0)),            # bv
        ],
        out_specs=out_spec,
    )

    out = pl.pallas_call(
        kernel,
        grid_spec=grid_spec,
        out_shape=out_shape,
        compiler_params=pltpu.CompilerParams(
            dimension_semantics=("parallel",),
            vmem_limit_bytes=vmem_budget_bytes),
    )(pts, vec, wq_s, bq_s, wk, bk, wv, bv)

    if pack_output:
        out = out.reshape(B_pad, Nv, out_dim)
    return out[:B] if B_pad != B else out


# --------------------------------------------------------------------------- #
# Pure-JAX reference (high precision)
# --------------------------------------------------------------------------- #
def cross_attn_ref(pts, vec, wq, bq, wk, bk, wv, bv):
    hp = jax.lax.Precision.HIGHEST
    out_dim = wq.shape[1]
    q = jnp.dot(vec, wq, precision=hp) + bq
    k = jnp.dot(pts, wk, precision=hp) + bk
    v = jnp.dot(pts, wv, precision=hp) + bv
    scores = jnp.einsum('bqd,bkd->bqk', q, k, precision=hp) / (out_dim ** 0.5)
    attn = jax.nn.softmax(scores, axis=-1)
    return jnp.einsum('bqk,bkd->bqd', attn, v, precision=hp)


if __name__ == "__main__":
    # Small shapes consistent with the module's forward:
    #   pts: (B, N_pts, pts_dim), vec: (B, N_vec, vec_dim)
    B, N_pts, N_vec = 2, 16, 8
    pts_dim, vec_dim, out_dim = 4, 6, 32

    key = jax.random.PRNGKey(0)
    k_pts, k_vec, k_wq, k_bq, k_wk, k_bk, k_wv, k_bv = jax.random.split(key, 8)

    pts = jax.random.normal(k_pts, (B, N_pts, pts_dim), dtype=jnp.float32)
    vec = jax.random.normal(k_vec, (B, N_vec, vec_dim), dtype=jnp.float32)

    # Deterministic synthetic parameters (nn.Linear: weight (out,in), bias (out,));
    # stored pre-transposed as (in, out) and bias as (1, out) for the kernel.
    def linear_init(kw, kb, in_dim, out_d):
        bound = 1.0 / (in_dim ** 0.5)
        w = jax.random.uniform(kw, (in_dim, out_d), minval=-bound, maxval=bound,
                               dtype=jnp.float32)
        b = jax.random.uniform(kb, (1, out_d), minval=-bound, maxval=bound,
                               dtype=jnp.float32)
        return w, b

    wq, bq = linear_init(k_wq, k_bq, vec_dim, out_dim)
    wk, bk = linear_init(k_wk, k_bk, pts_dim, out_dim)
    wv, bv = linear_init(k_wv, k_bv, pts_dim, out_dim)

    out = cross_attn_pallas(pts, vec, wq, bq, wk, bk, wv, bv)
    out = jax.block_until_ready(out)

    ref = cross_attn_ref(pts, vec, wq, bq, wk, bk, wv, bv)
    assert out.shape == (B, N_vec, out_dim)
    # Tolerance accounts for bf16 MXU operands (f32 accumulation, f32 softmax).
    assert jnp.allclose(out, ref, atol=3e-2, rtol=3e-2), \
        float(jnp.max(jnp.abs(out - ref)))

    print("KERNEL_OK")
</pallas_src>

<mosaic_0001>
module attributes {stable_mosaic.version = 11 : i64} {
  func.func @_cross_attn_kernel(%arg0: i32, %arg1: memref<1x16x4xf32, #tpu.memory_space<vmem>>, %arg2: memref<1x8x6xf32, #tpu.memory_space<vmem>>, %arg3: memref<6x32xf32, #tpu.memory_space<vmem>>, %arg4: memref<1x32xf32, #tpu.memory_space<vmem>>, %arg5: memref<4x32xf32, #tpu.memory_space<vmem>>, %arg6: memref<1x32xf32, #tpu.memory_space<vmem>>, %arg7: memref<4x32xf32, #tpu.memory_space<vmem>>, %arg8: memref<1x32xf32, #tpu.memory_space<vmem>>, %arg9: memref<1x1x256xf32, #tpu.memory_space<vmem>>) attributes {dimension_semantics = [#tpu.dimension_semantics<parallel>], iteration_bounds = array<i64: 2>, scalar_prefetch = 0 : i64, scratch_operands = 0 : i64, tpu.core_type = #tpu.core_type<tc>, window_params = [{transform_indices = @transform_0, window_bounds = array<i64: 1, 16, 4>}, {transform_indices = @transform_1, window_bounds = array<i64: 1, 8, 6>}, {pipeline_mode = #tpu.pipeline_mode<synchronous>, transform_indices = @transform_2, window_bounds = array<i64: 6, 32>}, {pipeline_mode = #tpu.pipeline_mode<synchronous>, transform_indices = @transform_3, window_bounds = array<i64: 1, 32>}, {pipeline_mode = #tpu.pipeline_mode<synchronous>, transform_indices = @transform_4, window_bounds = array<i64: 4, 32>}, {pipeline_mode = #tpu.pipeline_mode<synchronous>, transform_indices = @transform_5, window_bounds = array<i64: 1, 32>}, {pipeline_mode = #tpu.pipeline_mode<synchronous>, transform_indices = @transform_6, window_bounds = array<i64: 4, 32>}, {pipeline_mode = #tpu.pipeline_mode<synchronous>, transform_indices = @transform_7, window_bounds = array<i64: 1, 32>}, {transform_indices = @transform_8, window_bounds = array<i64: 1, 1, 256>}]} {
    %c0 = arith.constant 0 : index
    %c0_0 = arith.constant 0 : index
    %c0_1 = arith.constant 0 : index
    %0 = vector.load %arg2[%c0, %c0_0, %c0_1] : memref<1x8x6xf32, #tpu.memory_space<vmem>>, vector<1x8x6xf32>
    %1 = vector.shape_cast %0 : vector<1x8x6xf32> to vector<8x6xf32>
    %2 = arith.truncf %1 : vector<8x6xf32> to vector<8x6xbf16>
    %c0_2 = arith.constant 0 : index
    %c0_3 = arith.constant 0 : index
    %c0_4 = arith.constant 0 : index
    %3 = vector.load %arg1[%c0_2, %c0_3, %c0_4] : memref<1x16x4xf32, #tpu.memory_space<vmem>>, vector<1x16x4xf32>
    %4 = vector.shape_cast %3 : vector<1x16x4xf32> to vector<16x4xf32>
    %5 = arith.truncf %4 : vector<16x4xf32> to vector<16x4xbf16>
    %c0_5 = arith.constant 0 : index
    %c0_6 = arith.constant 0 : index
    %6 = vector.load %arg3[%c0_5, %c0_6] : memref<6x32xf32, #tpu.memory_space<vmem>>, vector<6x32xf32>
    %7 = arith.truncf %6 : vector<6x32xf32> to vector<6x32xbf16>
    %cst = arith.constant dense<0.000000e+00> : vector<8x32xf32>
    %8 = tpu.matmul %2, %7, %cst {dimension_numbers = #tpu.dot_dimension_numbers<[1], [0], [0], [1], [0, 0, 1, 1], [], []>} : vector<8x6xbf16>, vector<6x32xbf16>, vector<8x32xf32> -> vector<8x32xf32>
    %c0_7 = arith.constant 0 : index
    %c0_8 = arith.constant 0 : index
    %9 = vector.load %arg4[%c0_7, %c0_8] : memref<1x32xf32, #tpu.memory_space<vmem>>, vector<1x32xf32>
    %10 = vector.broadcast %9 : vector<1x32xf32> to vector<8x32xf32>
    %11 = arith.addf %8, %10 : vector<8x32xf32>
    %c0_9 = arith.constant 0 : index
    %c0_10 = arith.constant 0 : index
    %12 = vector.load %arg5[%c0_9, %c0_10] : memref<4x32xf32, #tpu.memory_space<vmem>>, vector<4x32xf32>
    %13 = arith.truncf %12 : vector<4x32xf32> to vector<4x32xbf16>
    %cst_11 = arith.constant dense<0.000000e+00> : vector<16x32xf32>
    %14 = tpu.matmul %5, %13, %cst_11 {dimension_numbers = #tpu.dot_dimension_numbers<[1], [0], [0], [1], [0, 0, 1, 1], [], []>} : vector<16x4xbf16>, vector<4x32xbf16>, vector<16x32xf32> -> vector<16x32xf32>
    %c0_12 = arith.constant 0 : index
    %c0_13 = arith.constant 0 : index
    %15 = vector.load %arg6[%c0_12, %c0_13] : memref<1x32xf32, #tpu.memory_space<vmem>>, vector<1x32xf32>
    %16 = vector.broadcast %15 : vector<1x32xf32> to vector<16x32xf32>
    %17 = arith.addf %14, %16 : vector<16x32xf32>
    %c0_14 = arith.constant 0 : index
    %c0_15 = arith.constant 0 : index
    %18 = vector.load %arg7[%c0_14, %c0_15] : memref<4x32xf32, #tpu.memory_space<vmem>>, vector<4x32xf32>
    %19 = arith.truncf %18 : vector<4x32xf32> to vector<4x32xbf16>
    %cst_16 = arith.constant dense<0.000000e+00> : vector<16x32xf32>
    %20 = tpu.matmul %5, %19, %cst_16 {dimension_numbers = #tpu.dot_dimension_numbers<[1], [0], [0], [1], [0, 0, 1, 1], [], []>} : vector<16x4xbf16>, vector<4x32xbf16>, vector<16x32xf32> -> vector<16x32xf32>
    %c0_17 = arith.constant 0 : index
    %c0_18 = arith.constant 0 : index
    %21 = vector.load %arg8[%c0_17, %c0_18] : memref<1x32xf32, #tpu.memory_space<vmem>>, vector<1x32xf32>
    %22 = vector.broadcast %21 : vector<1x32xf32> to vector<16x32xf32>
    %23 = arith.addf %20, %22 : vector<16x32xf32>
    %24 = vector.shape_cast %11 : vector<8x32xf32> to vector<1x8x32xf32>
    %25 = arith.truncf %24 : vector<1x8x32xf32> to vector<1x8x32xbf16>
    %26 = vector.shape_cast %17 : vector<16x32xf32> to vector<1x16x32xf32>
    %27 = arith.truncf %26 : vector<1x16x32xf32> to vector<1x16x32xbf16>
    %28 = vector.shape_cast %23 : vector<16x32xf32> to vector<1x16x32xf32>
    %29 = arith.truncf %28 : vector<1x16x32xf32> to vector<1x16x32xbf16>
    "tpu.trace_start"() <{level = 10 : i32, message = "bqd,bkd->bqk"}> : () -> ()
    %cst_19 = arith.constant dense<0.000000e+00> : vector<1x8x16xf32>
    %30 = tpu.matmul %25, %27, %cst_19 {dimension_numbers = #tpu.dot_dimension_numbers<[2], [2], [1], [1], [0, 0, 0, 1, 1, 1], [0], [0]>} : vector<1x8x32xbf16>, vector<1x16x32xbf16>, vector<1x8x16xf32> -> vector<1x8x16xf32>
    "tpu.trace_stop"() : () -> ()
    %cst_20 = arith.constant dense<0xFF800000> : vector<1x8xf32>
    %31 = vector.multi_reduction <maximumf>, %30, %cst_20 [2] : vector<1x8x16xf32> to vector<1x8xf32>
    %32 = vector.shape_cast %31 : vector<1x8xf32> to vector<1x8x1xf32>
    %33 = vector.broadcast %32 : vector<1x8x1xf32> to vector<1x8x16xf32>
    %34 = arith.subf %30, %33 : vector<1x8x16xf32>
    %35 = math.exp %34 : vector<1x8x16xf32>
    %cst_21 = arith.constant dense<0.000000e+00> : vector<1x8xf32>
    %36 = vector.multi_reduction <add>, %35, %cst_21 [2] : vector<1x8x16xf32> to vector<1x8xf32>
    %37 = vector.shape_cast %36 : vector<1x8xf32> to vector<1x8x1xf32>
    %38 = vector.broadcast %37 : vector<1x8x1xf32> to vector<1x8x16xf32>
    %39 = arith.divf %35, %38 : vector<1x8x16xf32>
    %40 = arith.truncf %39 : vector<1x8x16xf32> to vector<1x8x16xbf16>
    "tpu.trace_start"() <{level = 10 : i32, message = "bqk,bkd->bqd"}> : () -> ()
    %cst_22 = arith.constant dense<0.000000e+00> : vector<1x8x32xf32>
    %41 = tpu.matmul %40, %29, %cst_22 {dimension_numbers = #tpu.dot_dimension_numbers<[2], [1], [1], [2], [0, 0, 0, 1, 1, 2], [0], [0]>} : vector<1x8x16xbf16>, vector<1x16x32xbf16>, vector<1x8x32xf32> -> vector<1x8x32xf32>
    "tpu.trace_stop"() : () -> ()
    %42 = vector.extract_strided_slice %41 {offsets = [0, 0, 0], sizes = [1, 1, 32], strides = [1, 1, 1]} : vector<1x8x32xf32> to vector<1x1x32xf32>
    %43 = vector.shape_cast %42 : vector<1x1x32xf32> to vector<1x32xf32>
    %44 = vector.extract_strided_slice %41 {offsets = [0, 1, 0], sizes = [1, 1, 32], strides = [1, 1, 1]} : vector<1x8x32xf32> to vector<1x1x32xf32>
    %45 = vector.shape_cast %44 : vector<1x1x32xf32> to vector<1x32xf32>
    %46 = vector.extract_strided_slice %41 {offsets = [0, 2, 0], sizes = [1, 1, 32], strides = [1, 1, 1]} : vector<1x8x32xf32> to vector<1x1x32xf32>
    %47 = vector.shape_cast %46 : vector<1x1x32xf32> to vector<1x32xf32>
    %48 = vector.extract_strided_slice %41 {offsets = [0, 3, 0], sizes = [1, 1, 32], strides = [1, 1, 1]} : vector<1x8x32xf32> to vector<1x1x32xf32>
    %49 = vector.shape_cast %48 : vector<1x1x32xf32> to vector<1x32xf32>
    %50 = vector.extract_strided_slice %41 {offsets = [0, 4, 0], sizes = [1, 1, 32], strides = [1, 1, 1]} : vector<1x8x32xf32> to vector<1x1x32xf32>
    %51 = vector.shape_cast %50 : vector<1x1x32xf32> to vector<1x32xf32>
    %52 = vector.extract_strided_slice %41 {offsets = [0, 5, 0], sizes = [1, 1, 32], strides = [1, 1, 1]} : vector<1x8x32xf32> to vector<1x1x32xf32>
    %53 = vector.shape_cast %52 : vector<1x1x32xf32> to vector<1x32xf32>
    %54 = vector.extract_strided_slice %41 {offsets = [0, 6, 0], sizes = [1, 1, 32], strides = [1, 1, 1]} : vector<1x8x32xf32> to vector<1x1x32xf32>
    %55 = vector.shape_cast %54 : vector<1x1x32xf32> to vector<1x32xf32>
    %56 = vector.extract_strided_slice %41 {offsets = [0, 7, 0], sizes = [1, 1, 32], strides = [1, 1, 1]} : vector<1x8x32xf32> to vector<1x1x32xf32>
    %57 = vector.shape_cast %56 : vector<1x1x32xf32> to vector<1x32xf32>
    %58 = tpu.concatenate %43, %45, %47, %49, %51, %53, %55, %57 in 1 : vector<1x32xf32>, vector<1x32xf32>, vector<1x32xf32>, vector<1x32xf32>, vector<1x32xf32>, vector<1x32xf32>, vector<1x32xf32>, vector<1x32xf32> -> vector<1x256xf32>
    %c0_23 = arith.constant 0 : index
    %c0_24 = arith.constant 0 : index
    %c0_25 = arith.constant 0 : index
    %59 = vector.load %arg9[%c0_23, %c0_24, %c0_25] : memref<1x1x256xf32, #tpu.memory_space<vmem>>, vector<1x1x256xf32>
    %60 = vector.shape_cast %59 : vector<1x1x256xf32> to vector<1x256xf32>
    %61 = vector.shape_cast %58 : vector<1x256xf32> to vector<1x1x256xf32>
    tpu.vector_store %arg9[%c0_23, %c0_24, %c0_25], %61 {strides = array<i32>} : memref<1x1x256xf32, #tpu.memory_space<vmem>>, vector<1x1x256xf32>,
    return
  }
  func.func @transform_0(%arg0: i32) -> (i32, i32, i32) {
    %c0_i32 = arith.constant 0 : i32
    %c0_i32_0 = arith.constant 0 : i32
    %c0_i32_1 = arith.constant 0 : i32
    return %arg0, %c0_i32, %c0_i32_0 : i32, i32, i32
  }
  func.func @transform_1(%arg0: i32) -> (i32, i32, i32) {
    %c0_i32 = arith.constant 0 : i32
    %c0_i32_0 = arith.constant 0 : i32
    %c0_i32_1 = arith.constant 0 : i32
    return %arg0, %c0_i32, %c0_i32_0 : i32, i32, i32
  }
  func.func @transform_2(%arg0: i32) -> (i32, i32) {
    %c0_i32 = arith.constant 0 : i32
    %c0_i32_0 = arith.constant 0 : i32
    %c0_i32_1 = arith.constant 0 : i32
    return %c0_i32, %c0_i32_0 : i32, i32
  }
  func.func @transform_3(%arg0: i32) -> (i32, i32) {
    %c0_i32 = arith.constant 0 : i32
    %c0_i32_0 = arith.constant 0 : i32
    %c0_i32_1 = arith.constant 0 : i32
    return %c0_i32, %c0_i32_0 : i32, i32
  }
  func.func @transform_4(%arg0: i32) -> (i32, i32) {
    %c0_i32 = arith.constant 0 : i32
    %c0_i32_0 = arith.constant 0 : i32
    %c0_i32_1 = arith.constant 0 : i32
    return %c0_i32, %c0_i32_0 : i32, i32
  }
  func.func @transform_5(%arg0: i32) -> (i32, i32) {
    %c0_i32 = arith.constant 0 : i32
    %c0_i32_0 = arith.constant 0 : i32
    %c0_i32_1 = arith.constant 0 : i32
    return %c0_i32, %c0_i32_0 : i32, i32
  }
  func.func @transform_6(%arg0: i32) -> (i32, i32) {
    %c0_i32 = arith.constant 0 : i32
    %c0_i32_0 = arith.constant 0 : i32
    %c0_i32_1 = arith.constant 0 : i32
    return %c0_i32, %c0_i32_0 : i32, i32
  }
  func.func @transform_7(%arg0: i32) -> (i32, i32) {
    %c0_i32 = arith.constant 0 : i32
    %c0_i32_0 = arith.constant 0 : i32
    %c0_i32_1 = arith.constant 0 : i32
    return %c0_i32, %c0_i32_0 : i32, i32
  }
  func.func @transform_8(%arg0: i32) -> (i32, i32, i32) {
    %c0_i32 = arith.constant 0 : i32
    %c0_i32_0 = arith.constant 0 : i32
    %c0_i32_1 = arith.constant 0 : i32
    return %arg0, %c0_i32, %c0_i32_0 : i32, i32, i32
  }
}

</mosaic_0001>

<llo_original>
// kernel: tpu_custom_call.1
$region0: #{tpu_custom_call.1}
  #allocation0 [shape = 'u32[]', space=smem, size = 0x4, offset = 0x4, fixed_abs, tag = 'smem constant byte address 0x4 - core index']
  #allocation1 [shape = 'u32[144,128]{1,0:T(1,128)}', space=vmem, size = 0x12000, scoped, tag = 'internal scratch']
  %s0 = inlined_call_operand.vmem [shape: f32[2,16,4], index: 0, kind: input, shape index: {}]
  %s1 = inlined_call_operand.vmem [shape: f32[2,8,6], index: 1, kind: input, shape index: {}]
  %s2 = inlined_call_operand.vmem [shape: f32[6,32], index: 2, kind: input, shape index: {}]
  %s3 = inlined_call_operand.vmem [shape: f32[1,32], index: 3, kind: input, shape index: {}]
  %s4 = inlined_call_operand.vmem [shape: f32[4,32], index: 4, kind: input, shape index: {}]
  %s5 = inlined_call_operand.vmem [shape: f32[1,32], index: 5, kind: input, shape index: {}]
  %s6 = inlined_call_operand.vmem [shape: f32[4,32], index: 6, kind: input, shape index: {}]
  %s7 = inlined_call_operand.vmem [shape: f32[1,32], index: 7, kind: input, shape index: {}]
  %s8 = inlined_call_operand.hbm [shape: f32[2,1,256], index: 8, kind: output, shape index: {}]
  %s9 = sld [smem:[#allocation0]]
  $region65: #{tpu_custom_call.1} parent=0
    _
  %s11 = ssub.s32 1, %s9
  %s12 = scalar_select 0, %s11, %s9
  $region1: #{tpu_custom_call.1} parent=0
    #allocation2 [shape = 'u8[2048]{0}', space=vmem, size = 0x800, scoped, tag = 'output window, operand 0']
    #allocation3 [shape = 's32[2]{0}', space=sflag, size = 0x8, scoped, tag = 'scoped memory for tpu_custom_call.1']
    %13 = vsyncpa [#allocation3], 0
    %s14 = scalar_lea.sflag [#allocation3], 1
    %15 = vsyncpa %s14, 0
    loop: start=0, step=1, limit=4
    $region2: #{tpu_custom_call.1} parent=1 // loop_pre_header
      _
    $region3: #{tpu_custom_call.1} parent=1 // loop_header
      %s17 = sphi 0, %s21
      %p18 = scmp.ge.s32.totalorder %s17, 4
      %s27 = sphi 0, %s29
      %s30 = sphi 0, %s27
      %s31 = sphi 0, %s30
      %s47 = sphi 0, %s31
      %s53 = sphi 0, %s55
      %s56 = sphi 0, %s53
      %s57 = sphi 0, %s56
      %s73 = sphi 0, %s57
      %s77 = sphi 0, %s77
      %s79 = sphi 0, %s77
      %s80 = sphi 0, %s79
      %s94 = sphi 0, %s80
      %s98 = sphi 0, %s98
      %s100 = sphi 0, %s98
      %s101 = sphi 0, %s100
      %s115 = sphi 0, %s101
      %s119 = sphi 0, %s119
      %s121 = sphi 0, %s119
      %s122 = sphi 0, %s121
      %s136 = sphi 0, %s122
      %s140 = sphi 0, %s140
      %s142 = sphi 0, %s140
      %s143 = sphi 0, %s142
      %s157 = sphi 0, %s143
      %s161 = sphi 0, %s161
      %s163 = sphi 0, %s161
      %s164 = sphi 0, %s163
      %s178 = sphi 0, %s164
      %s182 = sphi 0, %s182
      %s184 = sphi 0, %s182
      %s185 = sphi 0, %s184
      %s199 = sphi 0, %s185
      %s205 = sphi 0, %s207
      %s208 = sphi 0, %s205
      %s209 = sphi 0, %s208
      %s225 = sphi 0, %s209
    $region4: #{tpu_custom_call.1} parent=1 // loop_header_branch
      %20 = sbr.rel (%p18) target = $region8
    $region5: #{tpu_custom_call.1} parent=1 // loop_body
      %s22 = ssub.s32 %s17, 1
      %s23 = ssub.s32 %s17, 2
      %s24 = sadd.s32 %s17, 1
      %s25 = ssub.s32 %s17, %s24
      %p26 = scmp.eq.s32.totalorder %s25, 0
      %s28 = sadd.s32 %s27, 1
      %s29 = scalar_select %p26, %s27, %s28
      %p32 = pneg %p26
      %p33 = scmp.eq.s32.totalorder %s17, 1
      %p34 = por %p32, %p33
      %p35 = scmp.ne.s32.totalorder %s27, %s30
      %p36 = scmp.eq.s32.totalorder %s17, 0
      %p37 = por %p35, %p36
      %p38 = scmp.ne.s32.totalorder %s27, %s30
      %p39 = scmp.eq.s32.totalorder %s22, 1
      %p40 = por %p38, %p39
      %p41 = scmp.ne.s32.totalorder %s30, %s31
      %p42 = scmp.eq.s32.totalorder %s22, 0
      %p43 = por %p41, %p42
      %p44 = scmp.ne.s32.totalorder %s30, %s31
      %p45 = scmp.eq.s32.totalorder %s23, 1
      %p46 = por %p44, %p45
      %p48 = scmp.ne.s32.totalorder %s31, %s47
      %p49 = scmp.eq.s32.totalorder %s23, 0
      %p50 = por %p48, %p49
      %s51 = ssub.s32 %s17, %s24
      %p52 = scmp.eq.s32.totalorder %s51, 0
      %s54 = sadd.s32 %s53, 1
      %s55 = scalar_select %p52, %s53, %s54
      %p58 = pneg %p52
      %p59 = scmp.eq.s32.totalorder %s17, 1
      %p60 = por %p58, %p59
      %p61 = scmp.ne.s32.totalorder %s53, %s56
      %p62 = scmp.eq.s32.totalorder %s17, 0
      %p63 = por %p61, %p62
      %p64 = scmp.ne.s32.totalorder %s53, %s56
      %p65 = scmp.eq.s32.totalorder %s22, 1
      %p66 = por %p64, %p65
      %p67 = scmp.ne.s32.totalorder %s56, %s57
      %p68 = scmp.eq.s32.totalorder %s22, 0
      %p69 = por %p67, %p68
      %p70 = scmp.ne.s32.totalorder %s56, %s57
      %p71 = scmp.eq.s32.totalorder %s23, 1
      %p72 = por %p70, %p71
      %p74 = scmp.ne.s32.totalorder %s57, %s73
      %p75 = scmp.eq.s32.totalorder %s23, 0
      %p76 = por %p74, %p75
      %s78 = sadd.s32 %s77, 1
      %p81 = scmp.eq.s32.totalorder %s17, 1
      %p82 = scmp.ne.s32.totalorder %s77, %s79
      %p83 = scmp.eq.s32.totalorder %s17, 0
      %p84 = por %p82, %p83
      %p85 = scmp.ne.s32.totalorder %s77, %s79
      %p86 = scmp.eq.s32.totalorder %s22, 1
      %p87 = por %p85, %p86
      %p88 = scmp.ne.s32.totalorder %s79, %s80
      %p89 = scmp.eq.s32.totalorder %s22, 0
      %p90 = por %p88, %p89
      %p91 = scmp.ne.s32.totalorder %s79, %s80
      %p92 = scmp.eq.s32.totalorder %s23, 1
      %p93 = por %p91, %p92
      %p95 = scmp.ne.s32.totalorder %s80, %s94
      %p96 = scmp.eq.s32.totalorder %s23, 0
      %p97 = por %p95, %p96
      %s99 = sadd.s32 %s98, 1
      %p102 = scmp.eq.s32.totalorder %s17, 1
      %p103 = scmp.ne.s32.totalorder %s98, %s100
      %p104 = scmp.eq.s32.totalorder %s17, 0
      %p105 = por %p103, %p104
      %p106 = scmp.ne.s32.totalorder %s98, %s100
      %p107 = scmp.eq.s32.totalorder %s22, 1
      %p108 = por %p106, %p107
      %p109 = scmp.ne.s32.totalorder %s100, %s101
      %p110 = scmp.eq.s32.totalorder %s22, 0
      %p111 = por %p109, %p110
      %p112 = scmp.ne.s32.totalorder %s100, %s101
      %p113 = scmp.eq.s32.totalorder %s23, 1
      %p114 = por %p112, %p113
      %p116 = scmp.ne.s32.totalorder %s101, %s115
      %p117 = scmp.eq.s32.totalorder %s23, 0
      %p118 = por %p116, %p117
      %s120 = sadd.s32 %s119, 1
      %p123 = scmp.eq.s32.totalorder %s17, 1
      %p124 = scmp.ne.s32.totalorder %s119, %s121
      %p125 = scmp.eq.s32.totalorder %s17, 0
      %p126 = por %p124, %p125
      %p127 = scmp.ne.s32.totalorder %s119, %s121
      %p128 = scmp.eq.s32.totalorder %s22, 1
      %p129 = por %p127, %p128
      %p130 = scmp.ne.s32.totalorder %s121, %s122
      %p131 = scmp.eq.s32.totalorder %s22, 0
      %p132 = por %p130, %p131
      %p133 = scmp.ne.s32.totalorder %s121, %s122
      %p134 = scmp.eq.s32.totalorder %s23, 1
      %p135 = por %p133, %p134
      %p137 = scmp.ne.s32.totalorder %s122, %s136
      %p138 = scmp.eq.s32.totalorder %s23, 0
      %p139 = por %p137, %p138
      %s141 = sadd.s32 %s140, 1
      %p144 = scmp.eq.s32.totalorder %s17, 1
      %p145 = scmp.ne.s32.totalorder %s140, %s142
      %p146 = scmp.eq.s32.totalorder %s17, 0
      %p147 = por %p145, %p146
      %p148 = scmp.ne.s32.totalorder %s140, %s142
      %p149 = scmp.eq.s32.totalorder %s22, 1
      %p150 = por %p148, %p149
      %p151 = scmp.ne.s32.totalorder %s142, %s143
      %p152 = scmp.eq.s32.totalorder %s22, 0
      %p153 = por %p151, %p152
      %p154 = scmp.ne.s32.totalorder %s142, %s143
      %p155 = scmp.eq.s32.totalorder %s23, 1
      %p156 = por %p154, %p155
      %p158 = scmp.ne.s32.totalorder %s143, %s157
      %p159 = scmp.eq.s32.totalorder %s23, 0
      %p160 = por %p158, %p159
      %s162 = sadd.s32 %s161, 1
      %p165 = scmp.eq.s32.totalorder %s17, 1
      %p166 = scmp.ne.s32.totalorder %s161, %s163
      %p167 = scmp.eq.s32.totalorder %s17, 0
      %p168 = por %p166, %p167
      %p169 = scmp.ne.s32.totalorder %s161, %s163
      %p170 = scmp.eq.s32.totalorder %s22, 1
      %p171 = por %p169, %p170
      %p172 = scmp.ne.s32.totalorder %s163, %s164
      %p173 = scmp.eq.s32.totalorder %s22, 0
      %p174 = por %p172, %p173
      %p175 = scmp.ne.s32.totalorder %s163, %s164
      %p176 = scmp.eq.s32.totalorder %s23, 1
      %p177 = por %p175, %p176
      %p179 = scmp.ne.s32.totalorder %s164, %s178
      %p180 = scmp.eq.s32.totalorder %s23, 0
      %p181 = por %p179, %p180
      %s183 = sadd.s32 %s182, 1
      %p186 = scmp.eq.s32.totalorder %s17, 1
      %p187 = scmp.ne.s32.totalorder %s182, %s184
      %p188 = scmp.eq.s32.totalorder %s17, 0
      %p189 = por %p187, %p188
      %p190 = scmp.ne.s32.totalorder %s182, %s184
      %p191 = scmp.eq.s32.totalorder %s22, 1
      %p192 = por %p190, %p191
      %p193 = scmp.ne.s32.totalorder %s184, %s185
      %p194 = scmp.eq.s32.totalorder %s22, 0
      %p195 = por %p193, %p194
      %p196 = scmp.ne.s32.totalorder %s184, %s185
      %p197 = scmp.eq.s32.totalorder %s23, 1
      %p198 = por %p196, %p197
      %p200 = scmp.ne.s32.totalorder %s185, %s199
      %p201 = scmp.eq.s32.totalorder %s23, 0
      %p202 = por %p200, %p201
      %s203 = ssub.s32 %s17, %s24
      %p204 = scmp.eq.s32.totalorder %s203, 0
      %s206 = sadd.s32 %s205, 1
      %s207 = scalar_select %p204, %s205, %s206
      %p210 = pneg %p204
      %p211 = scmp.eq.s32.totalorder %s17, 1
      %p212 = por %p210, %p211
      %p213 = scmp.ne.s32.totalorder %s205, %s208
      %p214 = scmp.eq.s32.totalorder %s17, 0
      %p215 = por %p213, %p214
      %p216 = scmp.ne.s32.totalorder %s205, %s208
      %p217 = scmp.eq.s32.totalorder %s22, 1
      %p218 = por %p216, %p217
      %p219 = scmp.ne.s32.totalorder %s208, %s209
      %p220 = scmp.eq.s32.totalorder %s22, 0
      %p221 = por %p219, %p220
      %p222 = scmp.ne.s32.totalorder %s208, %s209
      %p223 = scmp.eq.s32.totalorder %s23, 1
      %p224 = por %p222, %p223
      %p226 = scmp.ne.s32.totalorder %s209, %s225
      %p227 = scmp.eq.s32.totalorder %s23, 0
      %p228 = por %p226, %p227
      %p229 = scmp.le.s32.totalorder 1, %s17
      %p230 = scmp.lt.s32.totalorder %s17, 3
      %p231 = pnand %p229, %p230
      %p232 = pneg %p231
      // Predicated region
      $region9: #{tpu_custom_call.1} parent=5 // pred_check
        _
      $region10: #{tpu_custom_call.1} parent=5 // pred_check_branch
        %234 = sbr.rel (%p231) target = $region12
      $region11: #{tpu_custom_call.1} parent=5 // pred_region
        %s235 = ssub.s32 %s17, 1
        // Predicated region
        $region13: #{tpu_custom_call.1} parent=11 // pred_check
          %p236 = pneg %p90
        $region14: #{tpu_custom_call.1} parent=11 // pred_check_branch
          %238 = sbr.rel (%p236) target = $region16
        $region15: #{tpu_custom_call.1} parent=11 // pred_region
          _
        $region16: #{tpu_custom_call.1} parent=11 // pred_fallthru
          _
        // Predicated region
        $region17: #{tpu_custom_call.1} parent=11 // pred_check
          %p239 = pneg %p111
        $region18: #{tpu_custom_call.1} parent=11 // pred_check_branch
          %241 = sbr.rel (%p239) target = $region20
        $region19: #{tpu_custom_call.1} parent=11 // pred_region
          _
        $region20: #{tpu_custom_call.1} parent=11 // pred_fallthru
          _
        // Predicated region
        $region21: #{tpu_custom_call.1} parent=11 // pred_check
          %p242 = pneg %p132
        $region22: #{tpu_custom_call.1} parent=11 // pred_check_branch
          %244 = sbr.rel (%p242) target = $region24
        $region23: #{tpu_custom_call.1} parent=11 // pred_region
          _
        $region24: #{tpu_custom_call.1} parent=11 // pred_fallthru
          _
        // Predicated region
        $region25: #{tpu_custom_call.1} parent=11 // pred_check
          %p245 = pneg %p153
        $region26: #{tpu_custom_call.1} parent=11 // pred_check_branch
          %247 = sbr.rel (%p245) target = $region28
        $region27: #{tpu_custom_call.1} parent=11 // pred_region
          _
        $region28: #{tpu_custom_call.1} parent=11 // pred_fallthru
          _
        // Predicated region
        $region29: #{tpu_custom_call.1} parent=11 // pred_check
          %p248 = pneg %p174
        $region30: #{tpu_custom_call.1} parent=11 // pred_check_branch
          %250 = sbr.rel (%p248) target = $region32
        $region31: #{tpu_custom_call.1} parent=11 // pred_region
          _
        $region32: #{tpu_custom_call.1} parent=11 // pred_fallthru
          _
        // Predicated region
        $region33: #{tpu_custom_call.1} parent=11 // pred_check
          %p251 = pneg %p195
        $region34: #{tpu_custom_call.1} parent=11 // pred_check_branch
          %253 = sbr.rel (%p251) target = $region36
        $region35: #{tpu_custom_call.1} parent=11 // pred_region
          _
        $region36: #{tpu_custom_call.1} parent=11 // pred_fallthru
          _
      $region12: #{tpu_custom_call.1} parent=5 // pred_fallthru
        _
      %p254 = scmp.lt.s32.totalorder %s17, 2
      // Predicated region
      $region37: #{tpu_custom_call.1} parent=5 // pred_check
        %p255 = pneg %p254
      $region38: #{tpu_custom_call.1} parent=5 // pred_check_branch
        %257 = sbr.rel (%p255) target = $region40
      $region39: #{tpu_custom_call.1} parent=5 // pred_region
        // Predicated region
        $region41: #{tpu_custom_call.1} parent=39 // pred_check
          %p258 = pneg %p37
        $region42: #{tpu_custom_call.1} parent=39 // pred_check_branch
          %260 = sbr.rel (%p258) target = $region44
        $region43: #{tpu_custom_call.1} parent=39 // pred_region
          %p261 = scmp.lt.s32.totalorder %s17, 1
          %s262 = scalar_select %p261, %s17, 1
          %s263 = smul.addr %s262, 2
          %s264 = smul.addr %s263, 8
          %s265 = scalar_lea.vmem %s0, %s264
        $region44: #{tpu_custom_call.1} parent=39 // pred_fallthru
          _
        // Predicated region
        $region45: #{tpu_custom_call.1} parent=39 // pred_check
          %p266 = pneg %p63
        $region46: #{tpu_custom_call.1} parent=39 // pred_check_branch
          %268 = sbr.rel (%p266) target = $region48
        $region47: #{tpu_custom_call.1} parent=39 // pred_region
          %p269 = scmp.lt.s32.totalorder %s17, 1
          %s270 = scalar_select %p269, %s17, 1
          %s271 = smul.addr %s270, 8
          %s272 = scalar_lea.vmem %s1, %s271
        $region48: #{tpu_custom_call.1} parent=39 // pred_fallthru
          _
      $region40: #{tpu_custom_call.1} parent=5 // pred_fallthru
        _
      %p273 = scmp.le.s32.totalorder 1, %s17
      %p274 = scmp.lt.s32.totalorder %s17, 3
      %p275 = pnand %p273, %p274
      %p276 = pneg %p275
      // Predicated region
      $region49: #{tpu_custom_call.1} parent=5 // pred_check
        _
      $region50: #{tpu_custom_call.1} parent=5 // pred_check_branch
        %278 = sbr.rel (%p275) target = $region52
      $region51: #{tpu_custom_call.1} parent=5 // pred_region
        %s279 = ssub.s32 %s17, 1
        %p280 = scmp.lt.s32.totalorder %s22, 1
        %s281 = scalar_select %p280, %s22, 1
        %s282 = smul.addr %s281, 2
        %s283 = smul.addr %s282, 8
        %s284 = scalar_lea.vmem %s0, %s283
        %p285 = pneg %p43
        %p286 = pneg %p40
        %p287 = scmp.lt.s32.totalorder %s22, 1
        %s288 = scalar_select %p287, %s22, 1
        %s289 = smul.addr %s288, 8
        %s290 = scalar_lea.vmem %s1, %s289
        %p291 = pneg %p69
        %p292 = pneg %p66
        %p293 = pneg %p90
        %p294 = pneg %p87
        %p295 = pneg %p111
        %p296 = pneg %p108
        %p297 = pneg %p132
        %p298 = pneg %p129
        %p299 = pneg %p153
        %p300 = pneg %p150
        %p301 = pneg %p174
        %p302 = pneg %p171
        %p303 = pneg %p195
        %p304 = pneg %p192
        %p305 = pneg %p221
        %p306 = pneg %p218
        %s307 = sand.u32 %s208, 1
        %s308 = scalar_lea.sflag [#allocation3], %s307
        %s309 = sand.u32 %s208, 1
        %s310 = smul.addr %s309, 2
        %s311 = scalar_lea.vmem [#allocation2], %s310
        %p312 = scmp.lt.s32.totalorder %s22, 1
        %s313 = scalar_select %p312, %s22, 1
        %s314 = smul.addr %s313, 2
        %s315 = smul.addr %s314, 8
        %s316 = scalar_lea.vmem %s0, %s315
        %p317 = scmp.lt.s32.totalorder %s22, 1
        %s318 = scalar_select %p317, %s22, 1
        %s319 = smul.addr %s318, 8
        %s320 = scalar_lea.vmem %s1, %s319
        %v322 = vld [vmem:[%s320] sm:$0xff]
        %v323 = vpack.c.bf16 %v322, %v322
        %v324 = vld [vmem:[%s316] sm:$0xff]
        %v325 = vld [vmem:[%s316 + $0x8] sm:$0xff]
        %v326 = vpack.c.bf16 %v325, %v324
        %v327 = vld [vmem:[%s2] sm:$0x3f]
        %v328 = vpack.c.bf16 %v327, %v327
        %v329 = vld [vmem:[%s3] sm:$0x1]
        %v331 = vlaneseq
        %v332 = vshrl.u32 %v331, 7
        %v333 = vsub.s32 0, %v332
        %v334 = vrot.slane %v329, %v333
        %vm336 = vcmask 48128
        %v338 = vsel %vm336, %v323, 0
        %vm340 = vcmask 1042432
        %v342 = vsel %vm340, %v328, 0
        %344 = vmatprep.subr.bf16.mxu0 0
        %345 = vmatpush1.bf16.msra.mxu0 %v342
        %346 = vmatprep.subr.bf16.mxu0 0
        %347 = vmatpush1.bf16.msra.mxu0 0
        %348 = vmatprep.subr.bf16.mxu0 0
        %349 = vmatpush1.bf16.msra.mxu0 0
        %350 = vmatprep.subr.bf16.mxu0 0
        %351 = vmatpush1.bf16.msra.mxu0 0
        %352 = vmatprep.subr.bf16.mxu0 0
        %353 = vmatpush1.bf16.msra.mxu0 0
        %354 = vmatprep.subr.bf16.mxu0 0
        %355 = vmatpush1.bf16.msra.mxu0 0
        %356 = vmatprep.subr.bf16.mxu0 0
        %357 = vmatpush1.bf16.msra.mxu0 0
        %358 = vmatprep.subr.bf16.mxu0 0
        %359 = vmatpush1.bf16.msra.mxu0 0
        %360 = vmatprep.subr.bf16.mxu0 0
        %361 = vmatpush1.bf16.msra.mxu0 0
        %362 = vmatprep.subr.bf16.mxu0 0
        %363 = vmatpush1.bf16.msra.mxu0 0
        %364 = vmatprep.subr.bf16.mxu0 0
        %365 = vmatpush1.bf16.msra.mxu0 0
        %366 = vmatprep.subr.bf16.mxu0 0
        %367 = vmatpush1.bf16.msra.mxu0 0
        %368 = vmatprep.subr.bf16.mxu0 0
        %369 = vmatpush1.bf16.msra.mxu0 0
        %370 = vmatprep.subr.bf16.mxu0 0
        %371 = vmatpush1.bf16.msra.mxu0 0
        %372 = vmatprep.subr.bf16.mxu0 0
        %373 = vmatpush1.bf16.msra.mxu0 0
        %374 = vmatprep.subr.bf16.mxu0 0
        %375 = vmatpush1.bf16.msra.mxu0 0
        %376 = vmatprep.mubr.bf16.mxu0 0
        %377 = vmatmul.mubr.bf16.gmra.mrb[0].mxu0 %v338
        %v378 = vpop.f32.mrb[0].mxu0
        %v379 = vadd.f32 %v334, %v378
        %v380 = vpop.f32.mrb[0].mxu0
        %v381 = vpop.f32.mrb[0].mxu0
        %v382 = vpop.f32.mrb[0].mxu0
        %383 = vdwg.mxu0
        %v384 = vld [vmem:[%s4] sm:$0xf]
        %v385 = vpack.c.bf16 %v384, %v384
        %v386 = vld [vmem:[%s5] sm:$0x1]
        %v388 = vlaneseq
        %v389 = vshrl.u32 %v388, 7
        %v390 = vsub.s32 0, %v389
        %v391 = vrot.slane %v386, %v390
        %vm393 = vcmask 31744
        %v395 = vsel %vm393, %v326, 0
        %vm397 = vcmask 1041408
        %v399 = vsel %vm397, %v385, 0
        %401 = vmatprep.subr.bf16.mxu0 0
        %402 = vmatpush1.bf16.msra.mxu0 %v399
        %403 = vmatprep.subr.bf16.mxu0 0
        %404 = vmatpush1.bf16.msra.mxu0 0
        %405 = vmatprep.subr.bf16.mxu0 0
        %406 = vmatpush1.bf16.msra.mxu0 0
        %407 = vmatprep.subr.bf16.mxu0 0
        %408 = vmatpush1.bf16.msra.mxu0 0
        %409 = vmatprep.subr.bf16.mxu0 0
        %410 = vmatpush1.bf16.msra.mxu0 0
        %411 = vmatprep.subr.bf16.mxu0 0
        %412 = vmatpush1.bf16.msra.mxu0 0
        %413 = vmatprep.subr.bf16.mxu0 0
        %414 = vmatpush1.bf16.msra.mxu0 0
        %415 = vmatprep.subr.bf16.mxu0 0
        %416 = vmatpush1.bf16.msra.mxu0 0
        %417 = vmatprep.subr.bf16.mxu0 0
        %418 = vmatpush1.bf16.msra.mxu0 0
        %419 = vmatprep.subr.bf16.mxu0 0
        %420 = vmatpush1.bf16.msra.mxu0 0
        %421 = vmatprep.subr.bf16.mxu0 0
        %422 = vmatpush1.bf16.msra.mxu0 0
        %423 = vmatprep.subr.bf16.mxu0 0
        %424 = vmatpush1.bf16.msra.mxu0 0
        %425 = vmatprep.subr.bf16.mxu0 0
        %426 = vmatpush1.bf16.msra.mxu0 0
        %427 = vmatprep.subr.bf16.mxu0 0
        %428 = vmatpush1.bf16.msra.mxu0 0
        %429 = vmatprep.subr.bf16.mxu0 0
        %430 = vmatpush1.bf16.msra.mxu0 0
        %431 = vmatprep.subr.bf16.mxu0 0
        %432 = vmatpush1.bf16.msra.mxu0 0
        %433 = vmatprep.mubr.bf16.mxu0 0
        %434 = vmatmul.mubr.bf16.gmra.mrb[0].mxu0 %v395
        %v435 = vpop.f32.mrb[0].mxu0
        %v436 = vadd.f32 %v391, %v435
        %v437 = vpop.f32.mrb[0].mxu0
        %v438 = vpop.f32.mrb[0].mxu0
        %v439 = vadd.f32 %v391, %v438
        %v440 = vpop.f32.mrb[0].mxu0
        %441 = vdwg.mxu0
        %v442 = vld [vmem:[%s6] sm:$0xf]
        %v443 = vpack.c.bf16 %v442, %v442
        %v444 = vld [vmem:[%s7] sm:$0x1]
        %v446 = vlaneseq
        %v447 = vshrl.u32 %v446, 7
        %v448 = vsub.s32 0, %v447
        %v449 = vrot.slane %v444, %v448
        %v452 = vsel %vm397, %v443, 0
        %454 = vmatprep.subr.bf16.mxu0 0
        %455 = vmatpush1.bf16.msra.mxu0 %v452
        %456 = vmatprep.subr.bf16.mxu0 0
        %457 = vmatpush1.bf16.msra.mxu0 0
        %458 = vmatprep.subr.bf16.mxu0 0
        %459 = vmatpush1.bf16.msra.mxu0 0
        %460 = vmatprep.subr.bf16.mxu0 0
        %461 = vmatpush1.bf16.msra.mxu0 0
        %462 = vmatprep.subr.bf16.mxu0 0
        %463 = vmatpush1.bf16.msra.mxu0 0
        %464 = vmatprep.subr.bf16.mxu0 0
        %465 = vmatpush1.bf16.msra.mxu0 0
        %466 = vmatprep.subr.bf16.mxu0 0
        %467 = vmatpush1.bf16.msra.mxu0 0
        %468 = vmatprep.subr.bf16.mxu0 0
        %469 = vmatpush1.bf16.msra.mxu0 0
        %470 = vmatprep.subr.bf16.mxu0 0
        %471 = vmatpush1.bf16.msra.mxu0 0
        %472 = vmatprep.subr.bf16.mxu0 0
        %473 = vmatpush1.bf16.msra.mxu0 0
        %474 = vmatprep.subr.bf16.mxu0 0
        %475 = vmatpush1.bf16.msra.mxu0 0
        %476 = vmatprep.subr.bf16.mxu0 0
        %477 = vmatpush1.bf16.msra.mxu0 0
        %478 = vmatprep.subr.bf16.mxu0 0
        %479 = vmatpush1.bf16.msra.mxu0 0
        %480 = vmatprep.subr.bf16.mxu0 0
        %481 = vmatpush1.bf16.msra.mxu0 0
        %482 = vmatprep.subr.bf16.mxu0 0
        %483 = vmatpush1.bf16.msra.mxu0 0
        %484 = vmatprep.subr.bf16.mxu0 0
        %485 = vmatpush1.bf16.msra.mxu0 0
        %486 = vmatprep.mubr.bf16.mxu0 0
        %487 = vmatmul.mubr.bf16.gmra.mrb[0].mxu0 %v395
        %v488 = vpop.f32.mrb[0].mxu0
        %v489 = vadd.f32 %v449, %v488
        %v490 = vpop.f32.mrb[0].mxu0
        %v491 = vpop.f32.mrb[0].mxu0
        %v492 = vadd.f32 %v449, %v491
        %v493 = vpop.f32.mrb[0].mxu0
        %494 = vdwg.mxu0
        %v495 = vpack.c.bf16 %v379, %v379
        %v496 = vpack.c.bf16 %v439, %v436
        %v497 = vpack.c.bf16 %v492, %v489
        %vm498 = vcmask 261120
        %v500 = vsel %vm498, %v495, 0
        %v503 = vsel %vm498, %v496, 0
        %505 = vmatprep.subr.bf16.mxu0 0
        %506 = vmatpush1.bf16.xpose.msra.mxu0 %v503
        %507 = vmatprep.subr.bf16.mxu0 0
        %508 = vmatpush1.bf16.xpose.msra.mxu0 0
        %509 = vmatprep.subr.bf16.mxu0 0
        %510 = vmatpush1.bf16.xpose.msra.mxu0 0
        %511 = vmatprep.subr.bf16.mxu0 0
        %512 = vmatpush1.bf16.xpose.msra.mxu0 0
        %513 = vmatprep.subr.bf16.mxu0 0
        %514 = vmatpush1.bf16.xpose.msra.mxu0 0
        %515 = vmatprep.subr.bf16.mxu0 0
        %516 = vmatpush1.bf16.xpose.msra.mxu0 0
        %517 = vmatprep.subr.bf16.mxu0 0
        %518 = vmatpush1.bf16.xpose.msra.mxu0 0
        %519 = vmatprep.subr.bf16.mxu0 0
        %520 = vmatpush1.bf16.xpose.msra.mxu0 0
        %521 = vmatprep.subr.bf16.mxu0 0
        %522 = vmatpush1.bf16.xpose.msra.mxu0 0
        %523 = vmatprep.subr.bf16.mxu0 0
        %524 = vmatpush1.bf16.xpose.msra.mxu0 0
        %525 = vmatprep.subr.bf16.mxu0 0
        %526 = vmatpush1.bf16.xpose.msra.mxu0 0
        %527 = vmatprep.subr.bf16.mxu0 0
        %528 = vmatpush1.bf16.xpose.msra.mxu0 0
        %529 = vmatprep.subr.bf16.mxu0 0
        %530 = vmatpush1.bf16.xpose.msra.mxu0 0
        %531 = vmatprep.subr.bf16.mxu0 0
        %532 = vmatpush1.bf16.xpose.msra.mxu0 0
        %533 = vmatprep.subr.bf16.mxu0 0
        %534 = vmatpush1.bf16.xpose.msra.mxu0 0
        %535 = vmatprep.subr.bf16.mxu0 0
        %536 = vmatpush1.bf16.xpose.msra.mxu0 0
        %537 = vmatprep.mubr.bf16.mxu0 0
        %538 = vmatmul.mubr.bf16.gmra.mrb[0].mxu0 %v500
        %v539 = vpop.f32.mrb[0].mxu0
        %v540 = vadd.f32 0.0, %v539
        %v541 = vpop.f32.mrb[0].mxu0
        %v542 = vpop.f32.mrb[0].mxu0
        %v543 = vpop.f32.mrb[0].mxu0
        %544 = vdwg.mxu0
        %vm545 = vcmask 130048
        %v546 = vsel %vm545, %v540, -inf
        %547 = vmax.xlane.f32.xlu0 %v546
        %v548 = vpop.xlane.xlu0 %547
        %v549 = vsub.f32 %v540, %v548
        %v550 = vmul.f32 %v549, 1.442695
        %v551 = vpow.pop %v550
        %v552 = vsel %vm545, %v551, 0.0
        %553 = vadd.xlane.f32.xlu0 %v552
        %v554 = vpop.xlane.xlu0 %553
        %v555 = vrcp.pop %v554
        %v556 = vmul.f32 %v551, %v555
        %v557 = vpack.c.bf16 %v556, %v556
        %v559 = vsel %vm545, %v557, 0
        %561 = vmatprep.subr.bf16.mxu0 0
        %562 = vmatpush1.bf16.msra.mxu0 %v497
        %563 = vmatprep.subr.bf16.mxu0 0
        %564 = vmatpush1.bf16.msra.mxu0 0
        %565 = vmatprep.subr.bf16.mxu0 0
        %566 = vmatpush1.bf16.msra.mxu0 0
        %567 = vmatprep.subr.bf16.mxu0 0
        %568 = vmatpush1.bf16.msra.mxu0 0
        %569 = vmatprep.subr.bf16.mxu0 0
        %570 = vmatpush1.bf16.msra.mxu0 0
        %571 = vmatprep.subr.bf16.mxu0 0
        %572 = vmatpush1.bf16.msra.mxu0 0
        %573 = vmatprep.subr.bf16.mxu0 0
        %574 = vmatpush1.bf16.msra.mxu0 0
        %575 = vmatprep.subr.bf16.mxu0 0
        %576 = vmatpush1.bf16.msra.mxu0 0
        %577 = vmatprep.subr.bf16.mxu0 0
        %578 = vmatpush1.bf16.msra.mxu0 0
        %579 = vmatprep.subr.bf16.mxu0 0
        %580 = vmatpush1.bf16.msra.mxu0 0
        %581 = vmatprep.subr.bf16.mxu0 0
        %582 = vmatpush1.bf16.msra.mxu0 0
        %583 = vmatprep.subr.bf16.mxu0 0
        %584 = vmatpush1.bf16.msra.mxu0 0
        %585 = vmatprep.subr.bf16.mxu0 0
        %586 = vmatpush1.bf16.msra.mxu0 0
        %587 = vmatprep.subr.bf16.mxu0 0
        %588 = vmatpush1.bf16.msra.mxu0 0
        %589 = vmatprep.subr.bf16.mxu0 0
        %590 = vmatpush1.bf16.msra.mxu0 0
        %591 = vmatprep.subr.bf16.mxu0 0
        %592 = vmatpush1.bf16.msra.mxu0 0
        %593 = vmatprep.mubr.bf16.mxu0 0
        %594 = vmatmul.mubr.bf16.gmra.mrb[0].mxu0 %v559
        %v595 = vpop.f32.mrb[0].mxu0
        %v596 = vadd.f32 0.0, %v595
        %v597 = vpop.f32.mrb[0].mxu0
        %v598 = vpop.f32.mrb[0].mxu0
        %v599 = vpop.f32.mrb[0].mxu0
        %600 = vdwg.mxu0
        %v602 = vrot.slane %v596, 1
        %603 = vrot.lane.b32.xlu0 %v602, 32
        %v604 = vpop.permute.xlu0 %603
        %v606 = vrot.slane %v596, 2
        %607 = vrot.lane.b32.xlu0 %v606, 64
        %v608 = vpop.permute.xlu0 %607
        %v610 = vrot.slane %v596, 3
        %611 = vrot.lane.b32.xlu0 %v610, 96
        %v612 = vpop.permute.xlu0 %611
        %v614 = vrot.slane %v596, 4
        %v616 = vrot.slane %v596, 5
        %617 = vrot.lane.b32.xlu0 %v616, 32
        %v618 = vpop.permute.xlu0 %617
        %v620 = vrot.slane %v596, 6
        %621 = vrot.lane.b32.xlu0 %v620, 64
        %v622 = vpop.permute.xlu0 %621
        %v624 = vrot.slane %v596, 7
        %625 = vrot.lane.b32.xlu0 %v624, 96
        %v626 = vpop.permute.xlu0 %625
        %v628 = vsel %vm498, %v596, %v604
        %vm629 = vcmask 523264
        %v630 = vsel %vm629, %v628, %v608
        %vm631 = vcmask 785408
        %v632 = vsel %vm631, %v630, %v612
        %v633 = vsel %vm498, %v614, %v618
        %v634 = vsel %vm629, %v633, %v622
        %v635 = vsel %vm631, %v634, %v626
        %v638 = vcombine.low %v632, %v635
        %v640 = vunpack.c.l.s4 1966171168
        %v641 = vunpack.c.0.s8 %v640
        %v642 = vlaneseq
        %v643 = vshrl.u32 %v642, 7
        %v644 = vsub.s32 %v641, %v643
        %v645 = vrot.slane %v638, %v644
        %v647 = vunpack.c.l.s4 1966171168
        %v648 = vunpack.c.0.s8 %v647
        %v649 = vlaneseq
        %v650 = vshrl.u32 %v649, 7
        %v651 = vsub.s32 %v648, %v650
        %v652 = vrot.slane %v645, %v651
        %v654 = vlaneseq
        %vm655 = vcmp.ge.s32.totalorder %v654, 0
        %vm656 = vcmp.lt.s32.totalorder %v654, 256
        %vm657 = vmand %vm655, %vm656
        %658 = vst.msk [vmem:[%s311] sm:$0x3] %vm657, %v652
        %s659 = sand.u32 %s208, 1
        %s660 = scalar_lea.sflag [#allocation3], %s659
        %s661 = sand.u32 %s208, 1
        %s662 = smul.addr %s661, 2
        %s663 = scalar_lea.vmem [#allocation2], %s662
        // Predicated region
        $region53: #{tpu_custom_call.1} parent=51 // pred_check
          %p664 = pneg %p218
        $region54: #{tpu_custom_call.1} parent=51 // pred_check_branch
          %666 = sbr.rel (%p664) target = $region56
        $region55: #{tpu_custom_call.1} parent=51 // pred_region
          %s668 = ssub.s32 32, 32
          %669 = vsyncadd %s660, %s668
          %s670 = smul.addr %s22, 2
          %s671 = smul.addr %s670, 16
          %s672 = scalar_lea.hbm %s8, %s671
          %s674 = sshll.u32 %s663, 4
          %s675 = int_to_ptr.vmem [resolvable:$true] %s674
          %677 = dma.vmem_to_hbm [thread:$0]  %s675, 32, %s672, %s660
        $region56: #{tpu_custom_call.1} parent=51 // pred_fallthru
          _
      $region52: #{tpu_custom_call.1} parent=5 // pred_fallthru
        _
      %p678 = scmp.le.s32.totalorder 2, %s17
      // Predicated region
      $region57: #{tpu_custom_call.1} parent=5 // pred_check
        %p679 = pneg %p678
      $region58: #{tpu_custom_call.1} parent=5 // pred_check_branch
        %681 = sbr.rel (%p679) target = $region60
      $region59: #{tpu_custom_call.1} parent=5 // pred_region
        %s682 = ssub.s32 %s17, 2
        // Predicated region
        $region61: #{tpu_custom_call.1} parent=59 // pred_check
          %p683 = pneg %p224
        $region62: #{tpu_custom_call.1} parent=59 // pred_check_branch
          %685 = sbr.rel (%p683) target = $region64
        $region63: #{tpu_custom_call.1} parent=59 // pred_region
          %s686 = sand.u32 %s209, 1
          %s687 = scalar_lea.sflag [#allocation3], %s686
          %s688 = sand.u32 %s209, 1
          %s689 = smul.addr %s688, 2
          %s690 = scalar_lea.vmem [#allocation2], %s689
          %691 = dma.done %s687, 32
        $region64: #{tpu_custom_call.1} parent=59 // pred_fallthru
          _
      $region60: #{tpu_custom_call.1} parent=5 // pred_fallthru
        _
    $region6: #{tpu_custom_call.1} parent=1 // loop_footer
      %s21 = sadd.s32 1, %s17
    $region7: #{tpu_custom_call.1} parent=1 // loop_footer_branch
      %16 = sbr.rel target = $region3
    $region8: #{tpu_custom_call.1} parent=1 // loop_exit
      _
    %692 = vsyncpa [#allocation3], 1
    %s693 = scalar_lea.sflag [#allocation3], 1
    %694 = vsyncpa %s693, 1

</llo_original>
